<compile_context>
chip_gen: v6e
topology: v6e:2x2x1
jax: 0.10.0
libtpu: 0.0.40
codegen_flags: <defaults>
</compile_context>

<pallas_src>
import jax
import jax.numpy as jnp
from jax.experimental import pallas as pl
from jax.experimental.pallas import tpu as pltpu


# ---------------------------------------------------------------------------
# Kernel bodies
# ---------------------------------------------------------------------------

def _se_matmul_kernel(c_ref, x_ref, o_ref):
    # c_ref: (N, N) pre-permuted Coefficient; x_ref: (N, D); o_ref: (N, D) restored output.
    # Single MXU matmul over the whole problem — no grid, no accumulator, f32 accumulation.
    o_ref[...] = jnp.dot(c_ref[...], x_ref[...], preferred_element_type=jnp.float32)


def _se_matmul_kernel_batched(c_ref, x_ref, o_ref):
    # Blocks are (1, N, N) / (1, N, D) / (1, N, D): one independent problem per grid step.
    o_ref[0] = jnp.dot(c_ref[0], x_ref[0], preferred_element_type=jnp.float32)


# ---------------------------------------------------------------------------
# Pallas wrappers
# ---------------------------------------------------------------------------

def _se_cost(n, d, c_dtype, x_dtype, batch=1):
    flops = 2 * batch * n * n * d
    bytes_accessed = batch * (
        n * n * jnp.dtype(c_dtype).itemsize      # coefficient in
        + n * d * jnp.dtype(x_dtype).itemsize    # X in
        + n * d * 4                              # f32 out
    )
    return pl.CostEstimate(flops=flops, transcendentals=0, bytes_accessed=bytes_accessed)


def self_expression_matmul(c_perm, x):
    """X_restored = c_perm @ x as a single-step whole-array Pallas matmul.

    c_perm: (N, N)  (Coefficient with sort/unsort permutations already folded in)
    x:      (N, D)
    Returns (N, D) float32.
    """
    n, n2 = c_perm.shape
    nx, d = x.shape
    assert n == n2, "Coefficient must be square"
    assert nx == n, "row count of x must match Coefficient"

    # Whole arrays resident in VMEM (~80 KiB f32 total) — trivially fits every generation,
    # including v7x's 64 MiB, so no tiling / pipelining needed.
    return pl.pallas_call(
        _se_matmul_kernel,
        out_shape=jax.ShapeDtypeStruct((n, d), jnp.float32),
        in_specs=[
            pl.BlockSpec(memory_space=pltpu.MemorySpace.VMEM),
            pl.BlockSpec(memory_space=pltpu.MemorySpace.VMEM),
        ],
        out_specs=pl.BlockSpec(memory_space=pltpu.MemorySpace.VMEM),
        compiler_params=pltpu.CompilerParams(
            # Fuse the c_perm gather (input 0) into the custom call's operand.
            allow_input_fusion=[True, False],
        ),
        cost_estimate=_se_cost(n, d, c_perm.dtype, x.dtype),
    )(c_perm, x)


def self_expression_matmul_batched(c_perm, x):
    """out[b] = c_perm[b] @ x[b] for B independent problems in ONE pallas_call.

    c_perm: (B, N, N), x: (B, N, D).  grid=(B,) marked "parallel" so v7x's two
    TensorCores split the batch; per-call overhead is amortized across B.
    """
    b, n, n2 = c_perm.shape
    bx, nx, d = x.shape
    assert n == n2 and bx == b and nx == n

    # TODO(synk): on v5e, packing 2-4 problems into a single 128/256-row block-diagonal tile
    # would double MXU row utilization; kept one 64-row problem per grid step for simplicity.
    return pl.pallas_call(
        _se_matmul_kernel_batched,
        out_shape=jax.ShapeDtypeStruct((b, n, d), jnp.float32),
        grid=(b,),
        in_specs=[
            pl.BlockSpec((1, n, n), lambda i: (i, 0, 0)),
            pl.BlockSpec((1, n, d), lambda i: (i, 0, 0)),
        ],
        out_specs=pl.BlockSpec((1, n, d), lambda i: (i, 0, 0)),
        compiler_params=pltpu.CompilerParams(
            dimension_semantics=("parallel",),
            allow_input_fusion=[True, False],
        ),
        cost_estimate=_se_cost(n, d, c_perm.dtype, x.dtype, batch=b),
    )(c_perm, x)


# ---------------------------------------------------------------------------
# Forward-pass wrappers (match SelfExpressionLayer.class_forward semantics)
# ---------------------------------------------------------------------------

def self_expression_layer_forward(X, Y, coefficient, *, use_bf16=False):
    """JAX equivalent of SelfExpressionLayer.class_forward (== forward)."""
    indices = jnp.argsort(jnp.squeeze(Y))
    inv = jnp.argsort(indices)
    # Fold sort + unsort into the tiny Coefficient instead of gathering X twice:
    #   (C @ X[indices])[inv]  ==  C[inv][:, inv] @ X
    # This 64x64 double-gather is cheap index glue that fuses into the pallas_call operand
    # (allow_input_fusion); the kernel then directly produces X_restored.
    c_perm = coefficient[inv][:, inv]
    if use_bf16:
        # bf16 MXU inputs, f32 accumulation & output (looser numerics: ~3 decimal digits).
        c_perm = c_perm.astype(jnp.bfloat16)
        X = X.astype(jnp.bfloat16)
    return self_expression_matmul(c_perm, X)


def self_expression_layer_forward_batched(X, Y, coefficient, *, use_bf16=False):
    """Batched variant for B independent self-expression problems per step.

    X: (B, N, D), Y: (B, N), coefficient: (B, N, N).
    """
    def fold(coef_b, y_b):
        idx = jnp.argsort(jnp.squeeze(y_b))
        inv = jnp.argsort(idx)
        return coef_b[inv][:, inv]

    c_perm = jax.vmap(fold)(coefficient, Y)
    if use_bf16:
        c_perm = c_perm.astype(jnp.bfloat16)
        X = X.astype(jnp.bfloat16)
    return self_expression_matmul_batched(c_perm, X)


# ---------------------------------------------------------------------------
# Demo / self-check
# ---------------------------------------------------------------------------

if __name__ == "__main__":
    # Module hyperparameters (small, consistent with __init__):
    output_dim = 4       # number of classes
    domain_dim = 3       # number of domains
    batch_size = 8
    d_model = 128
    weight_c = 1e-3

    class_n = output_dim * batch_size * (domain_dim - 1)   # 4 * 8 * 2 = 64
    per_class = batch_size * (domain_dim - 1)

    key = jax.random.PRNGKey(0)
    kx, ky, kc, kbx, kby, kbc = jax.random.split(key, 6)

    # --- single-problem path --------------------------------------------------
    X = jax.random.normal(kx, (class_n, d_model), dtype=jnp.float32)
    Y_ordered = jnp.repeat(jnp.arange(output_dim, dtype=jnp.int32), per_class)
    Y = jax.random.permutation(ky, Y_ordered)
    coefficient = weight_c * jax.random.normal(kc, (class_n, class_n), dtype=jnp.float32)

    fwd = jax.jit(self_expression_layer_forward, static_argnames=("use_bf16",))
    out = jax.block_until_ready(fwd(X, Y, coefficient))

    indices = jnp.argsort(Y)
    ref = (coefficient @ X[indices])[jnp.argsort(indices)]
    assert out.shape == (class_n, d_model)
    assert jnp.allclose(out, ref, atol=1e-5, rtol=1e-5)

    # --- batched path (amortizes call overhead; parallel grid -> both v7x TCs) --
    B = 2
    Xb = jax.random.normal(kbx, (B, class_n, d_model), dtype=jnp.float32)
    Yb = jnp.stack([Y, jax.random.permutation(kby, Y_ordered)])
    Cb = weight_c * jax.random.normal(kbc, (B, class_n, class_n), dtype=jnp.float32)

    fwd_b = jax.jit(self_expression_layer_forward_batched, static_argnames=("use_bf16",))
    out_b = jax.block_until_ready(fwd_b(Xb, Yb, Cb))

    def _ref_one(x_b, y_b, c_b):
        idx = jnp.argsort(y_b)
        return (c_b @ x_b[idx])[jnp.argsort(idx)]

    ref_b = jax.vmap(_ref_one)(Xb, Yb, Cb)
    assert out_b.shape == (B, class_n, d_model)
    assert jnp.allclose(out_b, ref_b, atol=1e-5, rtol=1e-5)

    print("KERNEL_OK")
</pallas_src>

<mosaic_0001>
module attributes {stable_mosaic.version = 11 : i64} {
  func.func @_se_matmul_kernel(%arg0: memref<64x64xf32, #tpu.memory_space<vmem>>, %arg1: memref<64x128xf32, #tpu.memory_space<vmem>>, %arg2: memref<64x128xf32, #tpu.memory_space<vmem>>) attributes {dimension_semantics = [], scalar_prefetch = 0 : i64, scratch_operands = 0 : i64, tpu.core_type = #tpu.core_type<tc>} {
    %c0 = arith.constant 0 : index
    %c0_0 = arith.constant 0 : index
    %0 = vector.load %arg0[%c0, %c0_0] : memref<64x64xf32, #tpu.memory_space<vmem>>, vector<64x64xf32>
    %c0_1 = arith.constant 0 : index
    %c0_2 = arith.constant 0 : index
    %1 = vector.load %arg1[%c0_1, %c0_2] : memref<64x128xf32, #tpu.memory_space<vmem>>, vector<64x128xf32>
    %cst = arith.constant dense<0.000000e+00> : vector<64x128xf32>
    %2 = tpu.matmul %0, %1, %cst {dimension_numbers = #tpu.dot_dimension_numbers<[1], [0], [0], [1], [0, 0, 1, 1], [], []>} : vector<64x64xf32>, vector<64x128xf32>, vector<64x128xf32> -> vector<64x128xf32>
    %c0_3 = arith.constant 0 : index
    %c0_4 = arith.constant 0 : index
    %3 = vector.load %arg2[%c0_3, %c0_4] : memref<64x128xf32, #tpu.memory_space<vmem>>, vector<64x128xf32>
    tpu.vector_store %arg2[%c0_3, %c0_4], %2 {strides = array<i32>} : memref<64x128xf32, #tpu.memory_space<vmem>>, vector<64x128xf32>,
    return
  }
}

</mosaic_0001>

<llo_original>
// kernel: self_expression_layer_forward.2
$region0: #{self_expression_layer_forward.2}
  #allocation0 [shape = 'u32[]', space=smem, size = 0x4, offset = 0x4, fixed_abs, tag = 'smem constant byte address 0x4 - core index']
  #allocation1 [shape = 'u32[144,128]{1,0:T(1,128)}', space=vmem, size = 0x12000, scoped, tag = 'internal scratch']
  %s0 = inlined_call_operand.vmem [shape: f32[64,128], index: 0, kind: input, shape index: {}]
  %s1 = inlined_call_operand.vmem [shape: f32[64,64], index: 1, kind: input, shape index: {}]
  %s2 = inlined_call_operand.hbm [shape: f32[64,128], index: 2, kind: output, shape index: {}]
  %s3 = sld [smem:[#allocation0]]
  $region18: #{self_expression_layer_forward.2} parent=0
    _
  %s5 = ssub.s32 1, %s3
  %s6 = scalar_select 0, %s5, %s3
  $region1: #{self_expression_layer_forward.2} parent=0
    #allocation2 [shape = 'u8[32768]{0}', space=vmem, size = 0x8000, scoped, tag = 'output window, operand 0, single buffered']
    #allocation3 [shape = 's32[1]{0}', space=sflag, size = 0x4, scoped, tag = 'scoped memory for self_expression_layer_forward.2']
    #allocation4 [shape = 'u8[32768]{0}', space=vmem, size = 0x8000, dematerialized = true, scoped, tag = 'FusionAdapter Buffer %fusion.1 = f32[64,64]{1,0:T(8,128)} fusion(%param_1.11), kind=kLoop, calls=%fused_computation.3.clone, metadata={op_name="jit(self_expression_layer_forward)/gather" stack_frame_id=9}']
    %7 = vsyncpa [#allocation3], 0
    // Predicated region
    $region2: #{self_expression_layer_forward.2} parent=1 // pred_check
      _
    $region3: #{self_expression_layer_forward.2} parent=1 // pred_check_branch
      %9 = sbr.rel (0) target = $region5
    $region4: #{self_expression_layer_forward.2} parent=1 // pred_region
      _
    $region5: #{self_expression_layer_forward.2} parent=1 // pred_fallthru
      _
    // Predicated region
    $region6: #{self_expression_layer_forward.2} parent=1 // pred_check
      _
    $region7: #{self_expression_layer_forward.2} parent=1 // pred_check_branch
      %11 = sbr.rel (0) target = $region9
    $region8: #{self_expression_layer_forward.2} parent=1 // pred_region
      _
    $region9: #{self_expression_layer_forward.2} parent=1 // pred_fallthru
      _
    %v12 = vld [vmem:[%s1] sm:$0xff]
    %s14 = ssub.s32 256, 1
    %15 = vst [vmem:[#allocation4] sm:%s14] %v12
    %s16 = scalar_lea.vmem %s1, 8
    %v17 = vld [vmem:[%s16] sm:$0xff]
    %s18 = scalar_lea.vmem [#allocation4], 8
    %s20 = ssub.s32 256, 1
    %21 = vst [vmem:[%s18] sm:%s20] %v17
    %s22 = scalar_lea.vmem %s1, 16
    %v23 = vld [vmem:[%s22] sm:$0xff]
    %s24 = scalar_lea.vmem [#allocation4], 16
    %s26 = ssub.s32 256, 1
    %27 = vst [vmem:[%s24] sm:%s26] %v23
    %s28 = scalar_lea.vmem %s1, 24
    %v29 = vld [vmem:[%s28] sm:$0xff]
    %s30 = scalar_lea.vmem [#allocation4], 24
    %s32 = ssub.s32 256, 1
    %33 = vst [vmem:[%s30] sm:%s32] %v29
    %s34 = scalar_lea.vmem %s1, 32
    %v35 = vld [vmem:[%s34] sm:$0xff]
    %s36 = scalar_lea.vmem [#allocation4], 32
    %s38 = ssub.s32 256, 1
    %39 = vst [vmem:[%s36] sm:%s38] %v35
    %s40 = scalar_lea.vmem %s1, 40
    %v41 = vld [vmem:[%s40] sm:$0xff]
    %s42 = scalar_lea.vmem [#allocation4], 40
    %s44 = ssub.s32 256, 1
    %45 = vst [vmem:[%s42] sm:%s44] %v41
    %s46 = scalar_lea.vmem %s1, 48
    %v47 = vld [vmem:[%s46] sm:$0xff]
    %s48 = scalar_lea.vmem [#allocation4], 48
    %s50 = ssub.s32 256, 1
    %51 = vst [vmem:[%s48] sm:%s50] %v47
    %s52 = scalar_lea.vmem %s1, 56
    %v53 = vld [vmem:[%s52] sm:$0xff]
    %s54 = scalar_lea.vmem [#allocation4], 56
    %s56 = ssub.s32 256, 1
    %57 = vst [vmem:[%s54] sm:%s56] %v53
    %v58 = vld [vmem:[#allocation4] sm:$0xff]
    %v59 = vld [vmem:[#allocation4 + $0x8] sm:$0xff]
    %v60 = vld [vmem:[#allocation4 + $0x10] sm:$0xff]
    %v61 = vld [vmem:[#allocation4 + $0x18] sm:$0xff]
    %v62 = vld [vmem:[#allocation4 + $0x20] sm:$0xff]
    %v63 = vld [vmem:[#allocation4 + $0x28] sm:$0xff]
    %v64 = vld [vmem:[#allocation4 + $0x30] sm:$0xff]
    %v65 = vld [vmem:[#allocation4 + $0x38] sm:$0xff]
    %v66 = vld [vmem:[%s0] sm:$0xff]
    %v67 = vld [vmem:[%s0 + $0x8] sm:$0xff]
    %v68 = vld [vmem:[%s0 + $0x10] sm:$0xff]
    %v69 = vld [vmem:[%s0 + $0x18] sm:$0xff]
    %v70 = vld [vmem:[%s0 + $0x20] sm:$0xff]
    %v71 = vld [vmem:[%s0 + $0x28] sm:$0xff]
    %v72 = vld [vmem:[%s0 + $0x30] sm:$0xff]
    %v73 = vld [vmem:[%s0 + $0x38] sm:$0xff]
    %vm74 = vcmask 523264
    %v76 = vsel %vm74, %v58, 0
    %v79 = vsel %vm74, %v59, 0
    %v82 = vsel %vm74, %v60, 0
    %v85 = vsel %vm74, %v61, 0
    %v88 = vsel %vm74, %v62, 0
    %v91 = vsel %vm74, %v63, 0
    %v94 = vsel %vm74, %v64, 0
    %v97 = vsel %vm74, %v65, 0
    %99 = vmatprep.subr.mxu0 0.0
    %100 = vmatpush1.msra.mxu0 0.0
    %101 = vmatprep.subr.mxu0 0.0
    %102 = vmatpush1.msra.mxu0 0.0
    %103 = vmatprep.subr.mxu0 0.0
    %104 = vmatpush1.msra.mxu0 0.0
    %105 = vmatprep.subr.mxu0 0.0
    %106 = vmatpush1.msra.mxu0 0.0
    %107 = vmatprep.subr.mxu0 0.0
    %108 = vmatpush1.msra.mxu0 0.0
    %109 = vmatprep.subr.mxu0 0.0
    %110 = vmatpush1.msra.mxu0 0.0
    %111 = vmatprep.subr.mxu0 0.0
    %112 = vmatpush1.msra.mxu0 0.0
    %113 = vmatprep.subr.mxu0 0.0
    %114 = vmatpush1.msra.mxu0 0.0
    %115 = vmatprep.subr.mxu0 0.0
    %116 = vmatpush1.msra.mxu0 %v73
    %117 = vmatprep.subr.mxu0 0.0
    %118 = vmatpush1.msra.mxu0 %v72
    %119 = vmatprep.subr.mxu0 0.0
    %120 = vmatpush1.msra.mxu0 %v71
    %121 = vmatprep.subr.mxu0 0.0
    %122 = vmatpush1.msra.mxu0 %v70
    %123 = vmatprep.subr.mxu0 0.0
    %124 = vmatpush1.msra.mxu0 %v69
    %125 = vmatprep.subr.mxu0 0.0
    %126 = vmatpush1.msra.mxu0 %v68
    %127 = vmatprep.subr.mxu0 0.0
    %128 = vmatpush1.msra.mxu0 %v67
    %129 = vmatprep.subr.mxu0 0.0
    %130 = vmatpush1.msra.mxu0 %v66
    %131 = vmatprep.subr.mxu0 0.0
    %132 = vmatpush2.msra.mxu0 0.0
    %133 = vmatprep.subr.mxu0 0.0
    %134 = vmatpush2.msra.mxu0 0.0
    %135 = vmatprep.subr.mxu0 0.0
    %136 = vmatpush2.msra.mxu0 0.0
    %137 = vmatprep.subr.mxu0 0.0
    %138 = vmatpush2.msra.mxu0 0.0
    %139 = vmatprep.subr.mxu0 0.0
    %140 = vmatpush2.msra.mxu0 0.0
    %141 = vmatprep.subr.mxu0 0.0
    %142 = vmatpush2.msra.mxu0 0.0
    %143 = vmatprep.subr.mxu0 0.0
    %144 = vmatpush2.msra.mxu0 0.0
    %145 = vmatprep.subr.mxu0 0.0
    %146 = vmatpush2.msra.mxu0 0.0
    %147 = vmatprep.subr.mxu0 0.0
    %148 = vmatpush2.msra.mxu0 0.0
    %149 = vmatprep.subr.mxu0 0.0
    %150 = vmatpush2.msra.mxu0 0.0
    %151 = vmatprep.subr.mxu0 0.0
    %152 = vmatpush2.msra.mxu0 0.0
    %153 = vmatprep.subr.mxu0 0.0
    %154 = vmatpush2.msra.mxu0 0.0
    %155 = vmatprep.subr.mxu0 0.0
    %156 = vmatpush2.msra.mxu0 0.0
    %157 = vmatprep.subr.mxu0 0.0
    %158 = vmatpush2.msra.mxu0 0.0
    %159 = vmatprep.subr.mxu0 0.0
    %160 = vmatpush2.msra.mxu0 0.0
    %161 = vmatprep.subr.mxu0 0.0
    %162 = vmatpush2.msra.mxu0 0.0
    %163 = vmatprep.mubr.f32.mxu0 0.0
    %164 = vmatmul.mubr.f32.gmra.mxu0 %v76
    %v165 = vpop.f32.mrf.mxu0
    %v166 = vadd.f32 0.0, %v165
    %v167 = vpop.f32.mrf.mxu0
    %168 = vmatprep.mubr.f32.mxu0 0.0
    %169 = vmatmul.mubr.f32.gmra.mxu0 %v79
    %v170 = vpop.f32.mrf.mxu0
    %v171 = vadd.f32 0.0, %v170
    %v172 = vpop.f32.mrf.mxu0
    %173 = vmatprep.mubr.f32.mxu0 0.0
    %174 = vmatmul.mubr.f32.gmra.mxu0 %v82
    %v175 = vpop.f32.mrf.mxu0
    %v176 = vadd.f32 0.0, %v175
    %v177 = vpop.f32.mrf.mxu0
    %178 = vmatprep.mubr.f32.mxu0 0.0
    %179 = vmatmul.mubr.f32.gmra.mxu0 %v85
    %v180 = vpop.f32.mrf.mxu0
    %v181 = vadd.f32 0.0, %v180
    %v182 = vpop.f32.mrf.mxu0
    %183 = vmatprep.mubr.f32.mxu0 0.0
    %184 = vmatmul.mubr.f32.gmra.mxu0 %v88
    %v185 = vpop.f32.mrf.mxu0
    %v186 = vadd.f32 0.0, %v185
    %v187 = vpop.f32.mrf.mxu0
    %188 = vmatprep.mubr.f32.mxu0 0.0
    %189 = vmatmul.mubr.f32.gmra.mxu0 %v91
    %v190 = vpop.f32.mrf.mxu0
    %v191 = vadd.f32 0.0, %v190
    %v192 = vpop.f32.mrf.mxu0
    %193 = vmatprep.mubr.f32.mxu0 0.0
    %194 = vmatmul.mubr.f32.gmra.mxu0 %v94
    %v195 = vpop.f32.mrf.mxu0
    %v196 = vadd.f32 0.0, %v195
    %v197 = vpop.f32.mrf.mxu0
    %198 = vmatprep.mubr.f32.mxu0 0.0
    %199 = vmatmul.mubr.f32.gmra.mxu0 %v97
    %v200 = vpop.f32.mrf.mxu0
    %v201 = vadd.f32 0.0, %v200
    %v202 = vpop.f32.mrf.mxu0
    %203 = vdwg.mxu0
    %204 = vst [vmem:[#allocation2] sm:$0xff] %v166
    %205 = vst [vmem:[#allocation2 + $0x8] sm:$0xff] %v171
    %206 = vst [vmem:[#allocation2 + $0x10] sm:$0xff] %v176
    %207 = vst [vmem:[#allocation2 + $0x18] sm:$0xff] %v181
    %208 = vst [vmem:[#allocation2 + $0x20] sm:$0xff] %v186
    %209 = vst [vmem:[#allocation2 + $0x28] sm:$0xff] %v191
    %210 = vst [vmem:[#allocation2 + $0x30] sm:$0xff] %v196
    %211 = vst [vmem:[#allocation2 + $0x38] sm:$0xff] %v201
    // Predicated region
    $region10: #{self_expression_layer_forward.2} parent=1 // pred_check
      _
    $region11: #{self_expression_layer_forward.2} parent=1 // pred_check_branch
      %213 = sbr.rel (0) target = $region13
    $region12: #{self_expression_layer_forward.2} parent=1 // pred_region
      %s215 = ssub.s32 1024, 1024
      %216 = vsyncadd [#allocation3], %s215
      %s217 = sshll.u32 [#allocation2], 4
      %s218 = int_to_ptr.vmem [resolvable:$true] %s217
      %223 = dma.vmem_to_hbm [thread:$0]  %s218, 1024, %s2, [#allocation3], 128, 128, 8
    $region13: #{self_expression_layer_forward.2} parent=1 // pred_fallthru
      _
    // Predicated region
    $region14: #{self_expression_layer_forward.2} parent=1 // pred_check
      _
    $region15: #{self_expression_layer_forward.2} parent=1 // pred_check_branch
      %225 = sbr.rel (0) target = $region17
    $region16: #{self_expression_layer_forward.2} parent=1 // pred_region
      %226 = dma.done [#allocation3], 1024
    $region17: #{self_expression_layer_forward.2} parent=1 // pred_fallthru
      _
    %227 = vsyncpa [#allocation3], 1

</llo_original>
